<compile_context>
chip_gen: v7x
topology: tpu7x:2x2x1
jax: 0.10.0
libtpu: 0.0.40
codegen_flags: <defaults>
</compile_context>

<pallas_src>
import math

import jax
import jax.numpy as jnp
from jax import lax
from jax.experimental import pallas as pl
from jax.experimental.pallas import tpu as pltpu

IN_FEATURES = 3 * 32 * 32     # 3072, hardcoded by the module's first Linear
HIDDEN_DIM = 32               # small hidden dim for the synthetic run
NUM_CLASSES = 10
PADDED_CLASSES = 128          # lane-dense head width; sliced to NUM_CLASSES outside
BATCH = 2

# Packed layout of the small operands inside one (88, 128) f32 slab.
# Every sub-array starts on an 8-row (sublane-tile) boundary.
ROW_B1 = 0                    # (1, HIDDEN_DIM)
ROW_W2 = 8                    # (HIDDEN_DIM, HIDDEN_DIM)
ROW_B2 = 40                   # (1, HIDDEN_DIM)
ROW_W3 = 48                   # (HIDDEN_DIM, PADDED_CLASSES) (cols >= NUM_CLASSES are 0)
ROW_B3 = 80                   # (1, PADDED_CLASSES)
SLAB_ROWS = 88


def _gelu_exact(x):
    # PyTorch default nn.GELU: 0.5 * x * (1 + erf(x / sqrt(2)))
    return 0.5 * x * (1.0 + lax.erf(x * (1.0 / math.sqrt(2.0))))


def mlpmixer_kernel(x_ref, w1t_ref, slab_ref, out_ref):
    # Layer 1: bf16 (bm, 3072) contracted with bf16 lane-dense W1ᵀ (H, 3072)
    # over the last axes (transposed-RHS MXU matmul), f32 accumulation.
    h = lax.dot_general(
        x_ref[...], w1t_ref[...],
        dimension_numbers=(((1,), (1,)), ((), ())),
        preferred_element_type=jnp.float32,
    )
    b1 = slab_ref[ROW_B1:ROW_B1 + 1, :HIDDEN_DIM]
    h = _gelu_exact(h + b1)

    # Layer 2: (bm, H) @ (H, H) + (1, H) -> GELU (tiny; kept as one f32 matmul)
    w2 = slab_ref[ROW_W2:ROW_W2 + HIDDEN_DIM, :HIDDEN_DIM]
    b2 = slab_ref[ROW_B2:ROW_B2 + 1, :HIDDEN_DIM]
    h = _gelu_exact(jnp.dot(h, w2, preferred_element_type=jnp.float32) + b2)

    # Layer 3 (head, padded to 128 lanes): (bm, H) @ (H, 128) + (1, 128)
    w3 = slab_ref[ROW_W3:ROW_W3 + HIDDEN_DIM, :]
    b3 = slab_ref[ROW_B3:ROW_B3 + 1, :]
    o = jnp.dot(h, w3, preferred_element_type=jnp.float32) + b3
    out_ref[...] = o.astype(out_ref.dtype)


def _pick_block_b(b):
    """Batch-tile heuristic (rows).

    - b <= 8: one 8-row tile (block == padded array -> layout-exempt).
    - b >  8: multiple of 16 rows (bf16 sublane packing), chosen so the grid
      has >= 2 steps (v7x megacore) and sized ~ b / num_tiles to avoid padding
      waste on ragged batches, capped at 512 rows (fits v7x 32 MiB scoped VMEM).
    """
    if b <= 8:
        return 8
    num_tiles = max(2, (b + 511) // 512)
    block = ((b + num_tiles - 1) // num_tiles + 15) // 16 * 16
    return min(block, 512)


def _pack_slab(b1, w2, b2, w3, b3):
    """Pack the five small operands into one lane-dense f32 slab."""
    slab = jnp.zeros((SLAB_ROWS, PADDED_CLASSES), jnp.float32)
    slab = slab.at[ROW_B1, :HIDDEN_DIM].set(b1.reshape(-1))
    slab = slab.at[ROW_W2:ROW_W2 + HIDDEN_DIM, :HIDDEN_DIM].set(w2)
    slab = slab.at[ROW_B2, :HIDDEN_DIM].set(b2.reshape(-1))
    slab = slab.at[ROW_W3:ROW_W3 + HIDDEN_DIM, :NUM_CLASSES].set(w3)
    slab = slab.at[ROW_B3, :NUM_CLASSES].set(b3.reshape(-1))
    return slab


def fp4_mlpmixer_forward(x_nchw, params, *, block_b=None):
    """x_nchw: (B, 3, 32, 32). Returns (B, NUM_CLASSES) float32."""
    b = x_nchw.shape[0]
    x_flat = x_nchw.reshape(b, -1)  # matches nn.Flatten (C*H*W row-major)

    # Activations in bf16.  NOTE(perf): for large batches the producer should
    # emit bf16 directly (a wrapper cast re-reads the f32 array from HBM); the
    # cast here only covers the case where the caller hands us f32.
    if x_flat.dtype != jnp.bfloat16:
        x_flat = x_flat.astype(jnp.bfloat16)

    w1t, b1, w2, b2, w3, b3 = params
    # bf16 weight for the dominant matmul (halves the W1 HBM fetch); in
    # production this would be stored bf16 rather than cast per call.
    w1t_bf16 = w1t.astype(jnp.bfloat16)
    slab = _pack_slab(b1, w2, b2, w3, b3)

    if block_b is None:
        block_b = _pick_block_b(b)
    padded_b = ((b + block_b - 1) // block_b) * block_b
    if padded_b != b:
        # Padded rows compute GELU(0 + bias) garbage; they are sliced off below.
        x_flat = jnp.pad(x_flat, ((0, padded_b - b), (0, 0)))

    grid = (padded_b // block_b,)

    # VMEM budget from the actual footprint (+ headroom), portable to v7x.
    x_bytes = 2 * block_b * IN_FEATURES * 2          # double-buffered bf16 x tile
    out_bytes = 2 * block_b * PADDED_CLASSES * 4     # double-buffered f32 out tile
    w_bytes = (HIDDEN_DIM * IN_FEATURES * 2          # bf16 W1ᵀ (single-buffered)
               + SLAB_ROWS * PADDED_CLASSES * 4)     # f32 slab (single-buffered)
    vmem_limit = min(max(x_bytes + out_bytes + w_bytes + (4 << 20), 8 << 20), 32 << 20)

    cost = pl.CostEstimate(
        flops=2 * padded_b * (IN_FEATURES * HIDDEN_DIM
                              + HIDDEN_DIM * HIDDEN_DIM
                              + HIDDEN_DIM * PADDED_CLASSES),
        transcendentals=2 * padded_b * HIDDEN_DIM,
        bytes_accessed=(2 * padded_b * IN_FEATURES          # bf16 x
                        + 2 * HIDDEN_DIM * IN_FEATURES      # bf16 W1ᵀ
                        + 4 * SLAB_ROWS * PADDED_CLASSES    # f32 slab
                        + 4 * padded_b * PADDED_CLASSES),   # f32 out
    )

    out_padded = pl.pallas_call(
        mlpmixer_kernel,
        out_shape=jax.ShapeDtypeStruct((padded_b, PADDED_CLASSES), jnp.float32),
        grid=grid,
        in_specs=[
            # activations: one batch tile per grid step
            pl.BlockSpec((block_b, IN_FEATURES), lambda i: (i, 0)),
            # weights: constant index_map -> VMEM-resident; single-buffered
            pl.BlockSpec((HIDDEN_DIM, IN_FEATURES), lambda i: (0, 0),
                         pipeline_mode=pl.Buffered(1)),
            pl.BlockSpec((SLAB_ROWS, PADDED_CLASSES), lambda i: (0, 0),
                         pipeline_mode=pl.Buffered(1)),
        ],
        out_specs=pl.BlockSpec((block_b, PADDED_CLASSES), lambda i: (i, 0)),
        compiler_params=pltpu.CompilerParams(
            dimension_semantics=("parallel",),
            vmem_limit_bytes=vmem_limit,
        ),
        cost_estimate=cost,
    )(x_flat, w1t_bf16, slab)

    return out_padded[:b, :NUM_CLASSES]


def init_params(key):
    """Deterministic init mimicking nn.Linear default (uniform +/- 1/sqrt(fan_in)).

    W1 is stored transposed (out, in) = (HIDDEN_DIM, 3072) so its last dim is a
    multiple of 128 (lane-dense DMA).  W2/W3 are stored (in, out); biases (1, out).
    """
    ks = jax.random.split(key, 6)

    def linear(kw, kb, fan_in, fan_out, transpose_w=False):
        bound = 1.0 / math.sqrt(fan_in)
        w_shape = (fan_out, fan_in) if transpose_w else (fan_in, fan_out)
        w = jax.random.uniform(kw, w_shape, jnp.float32, -bound, bound)
        b = jax.random.uniform(kb, (1, fan_out), jnp.float32, -bound, bound)
        return w, b

    w1t, b1 = linear(ks[0], ks[1], IN_FEATURES, HIDDEN_DIM, transpose_w=True)
    w2, b2 = linear(ks[2], ks[3], HIDDEN_DIM, HIDDEN_DIM)
    w3, b3 = linear(ks[4], ks[5], HIDDEN_DIM, NUM_CLASSES)
    return (w1t, b1, w2, b2, w3, b3)


def reference_forward(x_nchw, params):
    """Pure-JAX reference using the same bf16-quantized x / W1 the kernel sees."""
    w1t, b1, w2, b2, w3, b3 = params
    x = x_nchw.reshape(x_nchw.shape[0], -1)
    xq = x.astype(jnp.bfloat16).astype(jnp.float32)
    w1q = w1t.astype(jnp.bfloat16).astype(jnp.float32)
    hp = lax.Precision.HIGHEST
    h = _gelu_exact(jnp.dot(xq, w1q.T, precision=hp) + b1)
    h = _gelu_exact(jnp.dot(h, w2, precision=hp) + b2)
    return jnp.dot(h, w3, precision=hp) + b3


if __name__ == "__main__":
    key = jax.random.PRNGKey(0)
    k_x, k_p = jax.random.split(key)

    x = jax.random.normal(k_x, (BATCH, 3, 32, 32), jnp.float32)
    params = init_params(k_p)

    out = fp4_mlpmixer_forward(x, params)
    out = jax.block_until_ready(out)

    ref = reference_forward(x, params)
    assert out.shape == (BATCH, NUM_CLASSES)
    assert jnp.allclose(out, ref, atol=5e-3, rtol=5e-3), "mismatch vs reference"

    print("KERNEL_OK")
</pallas_src>

<mosaic_0001>
module attributes {stable_mosaic.version = 11 : i64} {
  func.func @mlpmixer_kernel(%arg0: i32, %arg1: memref<8x3072xbf16, #tpu.memory_space<vmem>>, %arg2: memref<32x3072xbf16, #tpu.memory_space<vmem>>, %arg3: memref<88x128xf32, #tpu.memory_space<vmem>>, %arg4: memref<8x128xf32, #tpu.memory_space<vmem>>) attributes {dimension_semantics = [#tpu.dimension_semantics<parallel>], iteration_bounds = array<i64: 1>, scalar_prefetch = 0 : i64, scratch_operands = 0 : i64, tpu.core_type = #tpu.core_type<tc>, window_params = [{transform_indices = @transform_0, window_bounds = array<i64: 8, 3072>}, {pipeline_mode = #tpu.pipeline_mode<synchronous>, transform_indices = @transform_1, window_bounds = array<i64: 32, 3072>}, {pipeline_mode = #tpu.pipeline_mode<synchronous>, transform_indices = @transform_2, window_bounds = array<i64: 88, 128>}, {transform_indices = @transform_3, window_bounds = array<i64: 8, 128>}]} {
    %c0 = arith.constant 0 : index
    %c0_0 = arith.constant 0 : index
    %0 = vector.load %arg1[%c0, %c0_0] : memref<8x3072xbf16, #tpu.memory_space<vmem>>, vector<8x3072xbf16>
    %c0_1 = arith.constant 0 : index
    %c0_2 = arith.constant 0 : index
    %1 = vector.load %arg2[%c0_1, %c0_2] : memref<32x3072xbf16, #tpu.memory_space<vmem>>, vector<32x3072xbf16>
    %cst = arith.constant dense<0.000000e+00> : vector<8x32xf32>
    %2 = tpu.matmul %0, %1, %cst {dimension_numbers = #tpu.dot_dimension_numbers<[1], [1], [0], [0], [0, 0, 1, 0], [], []>} : vector<8x3072xbf16>, vector<32x3072xbf16>, vector<8x32xf32> -> vector<8x32xf32>
    %c0_3 = arith.constant 0 : index
    %c0_4 = arith.constant 0 : index
    %3 = vector.load %arg3[%c0_3, %c0_4] : memref<88x128xf32, #tpu.memory_space<vmem>>, vector<1x32xf32>
    %4 = vector.broadcast %3 : vector<1x32xf32> to vector<8x32xf32>
    %5 = arith.addf %2, %4 : vector<8x32xf32>
    %cst_5 = arith.constant 5.000000e-01 : f32
    %6 = vector.broadcast %cst_5 : f32 to vector<8x32xf32>
    %7 = arith.mulf %6, %5 : vector<8x32xf32>
    %cst_6 = arith.constant 0.707106769 : f32
    %8 = vector.broadcast %cst_6 : f32 to vector<8x32xf32>
    %9 = arith.mulf %5, %8 : vector<8x32xf32>
    %10 = math.erf %9 : vector<8x32xf32>
    %cst_7 = arith.constant 1.000000e+00 : f32
    %11 = vector.broadcast %cst_7 : f32 to vector<8x32xf32>
    %12 = arith.addf %11, %10 : vector<8x32xf32>
    %13 = arith.mulf %7, %12 : vector<8x32xf32>
    %c8 = arith.constant 8 : index
    %c0_8 = arith.constant 0 : index
    %14 = vector.load %arg3[%c8, %c0_8] : memref<88x128xf32, #tpu.memory_space<vmem>>, vector<32x32xf32>
    %c40 = arith.constant 40 : index
    %c0_9 = arith.constant 0 : index
    %15 = vector.load %arg3[%c40, %c0_9] : memref<88x128xf32, #tpu.memory_space<vmem>>, vector<1x32xf32>
    %cst_10 = arith.constant dense<0.000000e+00> : vector<8x32xf32>
    %16 = tpu.matmul %13, %14, %cst_10 {dimension_numbers = #tpu.dot_dimension_numbers<[1], [0], [0], [1], [0, 0, 1, 1], [], []>} : vector<8x32xf32>, vector<32x32xf32>, vector<8x32xf32> -> vector<8x32xf32>
    %17 = vector.broadcast %15 : vector<1x32xf32> to vector<8x32xf32>
    %18 = arith.addf %16, %17 : vector<8x32xf32>
    %cst_11 = arith.constant 5.000000e-01 : f32
    %19 = vector.broadcast %cst_11 : f32 to vector<8x32xf32>
    %20 = arith.mulf %19, %18 : vector<8x32xf32>
    %cst_12 = arith.constant 0.707106769 : f32
    %21 = vector.broadcast %cst_12 : f32 to vector<8x32xf32>
    %22 = arith.mulf %18, %21 : vector<8x32xf32>
    %23 = math.erf %22 : vector<8x32xf32>
    %cst_13 = arith.constant 1.000000e+00 : f32
    %24 = vector.broadcast %cst_13 : f32 to vector<8x32xf32>
    %25 = arith.addf %24, %23 : vector<8x32xf32>
    %26 = arith.mulf %20, %25 : vector<8x32xf32>
    %c48 = arith.constant 48 : index
    %c0_14 = arith.constant 0 : index
    %27 = vector.load %arg3[%c48, %c0_14] : memref<88x128xf32, #tpu.memory_space<vmem>>, vector<32x128xf32>
    %c80 = arith.constant 80 : index
    %c0_15 = arith.constant 0 : index
    %28 = vector.load %arg3[%c80, %c0_15] : memref<88x128xf32, #tpu.memory_space<vmem>>, vector<1x128xf32>
    %cst_16 = arith.constant dense<0.000000e+00> : vector<8x128xf32>
    %29 = tpu.matmul %26, %27, %cst_16 {dimension_numbers = #tpu.dot_dimension_numbers<[1], [0], [0], [1], [0, 0, 1, 1], [], []>} : vector<8x32xf32>, vector<32x128xf32>, vector<8x128xf32> -> vector<8x128xf32>
    %30 = vector.broadcast %28 : vector<1x128xf32> to vector<8x128xf32>
    %31 = arith.addf %29, %30 : vector<8x128xf32>
    %c0_17 = arith.constant 0 : index
    %c0_18 = arith.constant 0 : index
    %32 = vector.load %arg4[%c0_17, %c0_18] : memref<8x128xf32, #tpu.memory_space<vmem>>, vector<8x128xf32>
    tpu.vector_store %arg4[%c0_17, %c0_18], %31 {strides = array<i32>} : memref<8x128xf32, #tpu.memory_space<vmem>>, vector<8x128xf32>,
    return
  }
  func.func @transform_0(%arg0: i32) -> (i32, i32) {
    %c0_i32 = arith.constant 0 : i32
    %c0_i32_0 = arith.constant 0 : i32
    return %arg0, %c0_i32 : i32, i32
  }
  func.func @transform_1(%arg0: i32) -> (i32, i32) {
    %c0_i32 = arith.constant 0 : i32
    %c0_i32_0 = arith.constant 0 : i32
    %c0_i32_1 = arith.constant 0 : i32
    return %c0_i32, %c0_i32_0 : i32, i32
  }
  func.func @transform_2(%arg0: i32) -> (i32, i32) {
    %c0_i32 = arith.constant 0 : i32
    %c0_i32_0 = arith.constant 0 : i32
    %c0_i32_1 = arith.constant 0 : i32
    return %c0_i32, %c0_i32_0 : i32, i32
  }
  func.func @transform_3(%arg0: i32) -> (i32, i32) {
    %c0_i32 = arith.constant 0 : i32
    %c0_i32_0 = arith.constant 0 : i32
    return %arg0, %c0_i32 : i32, i32
  }
}

</mosaic_0001>

<llo_original>
// kernel: tpu_custom_call.1
$region0: #{tpu_custom_call.1}
  #allocation0 [shape = 'u32[]', space=smem, size = 0x4, offset = 0x4, fixed_abs, tag = 'smem constant byte address 0x4 - core index']
  #allocation1 [shape = 'u32[144,128]{1,0:T(1,128)}', space=vmem, size = 0x12000, scoped, tag = 'internal scratch']
  %s0 = inlined_call_operand.hbm [shape: bf16[8,3072], index: 0, kind: input, shape index: {}]
  %s1 = inlined_call_operand.hbm [shape: bf16[32,3072], index: 1, kind: input, shape index: {}]
  %s2 = inlined_call_operand.hbm [shape: f32[88,128], index: 2, kind: input, shape index: {}]
  %s3 = inlined_call_operand.hbm [shape: f32[8,128], index: 3, kind: output, shape index: {}]
  %s4 = sld [smem:[#allocation0]]
  $region34: #{tpu_custom_call.1} parent=0
    _
  %s6 = ssub.s32 1, %s4
  %s7 = scalar_select 0, %s6, %s4
  $region1: #{tpu_custom_call.1} parent=0
    #allocation2 [shape = 'u8[49152]{0}', space=vmem, size = 0xc000, scoped, tag = 'input window, operand 0, single buffered']
    #allocation3 [shape = 's32[1]{0}', space=sflag, size = 0x4, scoped, tag = 'scoped memory for tpu_custom_call.1']
    #allocation4 [shape = 's32[1]{0}', space=sflag, size = 0x4, scoped, tag = 'scoped memory for tpu_custom_call.1']
    #allocation5 [shape = 'u8[196608]{0}', space=vmem, size = 0x30000, scoped, tag = 'input window, operand 1, single buffered']
    #allocation6 [shape = 's32[1]{0}', space=sflag, size = 0x4, scoped, tag = 'scoped memory for tpu_custom_call.1']
    #allocation7 [shape = 'u8[45056]{0}', space=vmem, size = 0xb000, scoped, tag = 'input window, operand 2, single buffered']
    #allocation8 [shape = 'u8[4096]{0}', space=vmem, size = 0x1000, scoped, tag = 'output window, operand 0, single buffered']
    %8 = vsyncpa [#allocation3], 0
    %9 = vsyncpa [#allocation6], 0
    %10 = vsyncpa [#allocation4], 0
    // Predicated region
    $region2: #{tpu_custom_call.1} parent=1 // pred_check
      _
    $region3: #{tpu_custom_call.1} parent=1 // pred_check_branch
      %12 = sbr.rel (0) target = $region5
    $region4: #{tpu_custom_call.1} parent=1 // pred_region
      %s14 = ssub.s32 1536, 1536
      %15 = vsyncadd [#allocation3], %s14
      %s17 = sshll.u32 [#allocation2], 4
      %s18 = int_to_ptr.vmem [resolvable:$true] %s17
      %20 = dma.hbm_to_vmem [thread:$0]  %s0, 1536, %s18, [#allocation3]
    $region5: #{tpu_custom_call.1} parent=1 // pred_fallthru
      _
    // Predicated region
    $region6: #{tpu_custom_call.1} parent=1 // pred_check
      _
    $region7: #{tpu_custom_call.1} parent=1 // pred_check_branch
      %22 = sbr.rel (0) target = $region9
    $region8: #{tpu_custom_call.1} parent=1 // pred_region
      %s24 = ssub.s32 6144, 6144
      %25 = vsyncadd [#allocation6], %s24
      %s26 = sshll.u32 [#allocation5], 4
      %s27 = int_to_ptr.vmem [resolvable:$true] %s26
      %32 = dma.hbm_to_vmem [thread:$0]  %s1, 6144, %s27, [#allocation6], 1536, 1536, 96
    $region9: #{tpu_custom_call.1} parent=1 // pred_fallthru
      _
    // Predicated region
    $region10: #{tpu_custom_call.1} parent=1 // pred_check
      _
    $region11: #{tpu_custom_call.1} parent=1 // pred_check_branch
      %34 = sbr.rel (0) target = $region13
    $region12: #{tpu_custom_call.1} parent=1 // pred_region
      %s36 = ssub.s32 1408, 1408
      %37 = vsyncadd [#allocation6], %s36
      %s38 = sshll.u32 [#allocation7], 4
      %s39 = int_to_ptr.vmem [resolvable:$true] %s38
      %44 = dma.hbm_to_vmem [thread:$0]  %s2, 1408, %s39, [#allocation6], 128, 128, 8
    $region13: #{tpu_custom_call.1} parent=1 // pred_fallthru
      _
    // Predicated region
    $region14: #{tpu_custom_call.1} parent=1 // pred_check
      _
    $region15: #{tpu_custom_call.1} parent=1 // pred_check_branch
      %46 = sbr.rel (0) target = $region17
    $region16: #{tpu_custom_call.1} parent=1 // pred_region
      %47 = dma.done [#allocation3], 1536
    $region17: #{tpu_custom_call.1} parent=1 // pred_fallthru
      _
    // Predicated region
    $region18: #{tpu_custom_call.1} parent=1 // pred_check
      _
    $region19: #{tpu_custom_call.1} parent=1 // pred_check_branch
      %49 = sbr.rel (0) target = $region21
    $region20: #{tpu_custom_call.1} parent=1 // pred_region
      %50 = dma.done [#allocation6], 6144
    $region21: #{tpu_custom_call.1} parent=1 // pred_fallthru
      _
    // Predicated region
    $region22: #{tpu_custom_call.1} parent=1 // pred_check
      _
    $region23: #{tpu_custom_call.1} parent=1 // pred_check_branch
      %52 = sbr.rel (0) target = $region25
    $region24: #{tpu_custom_call.1} parent=1 // pred_region
      %53 = dma.done [#allocation6], 1408
    $region25: #{tpu_custom_call.1} parent=1 // pred_fallthru
      _
    %v55 = vld [vmem:[#allocation2] sm:$0xff]
    %v56 = vld [vmem:[#allocation2 + $0x8] sm:$0xff]
    %v57 = vld [vmem:[#allocation2 + $0x10] sm:$0xff]
    %v58 = vld [vmem:[#allocation2 + $0x18] sm:$0xff]
    %v59 = vld [vmem:[#allocation2 + $0x20] sm:$0xff]
    %v60 = vld [vmem:[#allocation2 + $0x28] sm:$0xff]
    %v61 = vld [vmem:[#allocation2 + $0x30] sm:$0xff]
    %v62 = vld [vmem:[#allocation2 + $0x38] sm:$0xff]
    %v63 = vld [vmem:[#allocation2 + $0x40] sm:$0xff]
    %v64 = vld [vmem:[#allocation2 + $0x48] sm:$0xff]
    %v65 = vld [vmem:[#allocation2 + $0x50] sm:$0xff]
    %v66 = vld [vmem:[#allocation2 + $0x58] sm:$0xff]
    %v67 = vld [vmem:[#allocation5] sm:$0xff]
    %v68 = vld [vmem:[#allocation5 + $0x8] sm:$0xff]
    %v69 = vld [vmem:[#allocation5 + $0x10] sm:$0xff]
    %v70 = vld [vmem:[#allocation5 + $0x18] sm:$0xff]
    %v71 = vld [vmem:[#allocation5 + $0x20] sm:$0xff]
    %v72 = vld [vmem:[#allocation5 + $0x28] sm:$0xff]
    %v73 = vld [vmem:[#allocation5 + $0x30] sm:$0xff]
    %v74 = vld [vmem:[#allocation5 + $0x38] sm:$0xff]
    %v75 = vld [vmem:[#allocation5 + $0x40] sm:$0xff]
    %v76 = vld [vmem:[#allocation5 + $0x48] sm:$0xff]
    %v77 = vld [vmem:[#allocation5 + $0x50] sm:$0xff]
    %v78 = vld [vmem:[#allocation5 + $0x58] sm:$0xff]
    %v79 = vld [vmem:[#allocation5 + $0x60] sm:$0xff]
    %v80 = vld [vmem:[#allocation5 + $0x68] sm:$0xff]
    %v81 = vld [vmem:[#allocation5 + $0x70] sm:$0xff]
    %v82 = vld [vmem:[#allocation5 + $0x78] sm:$0xff]
    %v83 = vld [vmem:[#allocation5 + $0x80] sm:$0xff]
    %v84 = vld [vmem:[#allocation5 + $0x88] sm:$0xff]
    %v85 = vld [vmem:[#allocation5 + $0x90] sm:$0xff]
    %v86 = vld [vmem:[#allocation5 + $0x98] sm:$0xff]
    %v87 = vld [vmem:[#allocation5 + $0xa0] sm:$0xff]
    %v88 = vld [vmem:[#allocation5 + $0xa8] sm:$0xff]
    %v89 = vld [vmem:[#allocation5 + $0xb0] sm:$0xff]
    %v90 = vld [vmem:[#allocation5 + $0xb8] sm:$0xff]
    %v91 = vld [vmem:[#allocation5 + $0xc0] sm:$0xff]
    %v92 = vld [vmem:[#allocation5 + $0xc8] sm:$0xff]
    %v93 = vld [vmem:[#allocation5 + $0xd0] sm:$0xff]
    %v94 = vld [vmem:[#allocation5 + $0xd8] sm:$0xff]
    %v95 = vld [vmem:[#allocation5 + $0xe0] sm:$0xff]
    %v96 = vld [vmem:[#allocation5 + $0xe8] sm:$0xff]
    %v97 = vld [vmem:[#allocation5 + $0xf0] sm:$0xff]
    %v98 = vld [vmem:[#allocation5 + $0xf8] sm:$0xff]
    %v99 = vld [vmem:[#allocation5 + $0x100] sm:$0xff]
    %v100 = vld [vmem:[#allocation5 + $0x108] sm:$0xff]
    %v101 = vld [vmem:[#allocation5 + $0x110] sm:$0xff]
    %v102 = vld [vmem:[#allocation5 + $0x118] sm:$0xff]
    %v103 = vld [vmem:[#allocation5 + $0x120] sm:$0xff]
    %v104 = vld [vmem:[#allocation5 + $0x128] sm:$0xff]
    %v105 = vld [vmem:[#allocation5 + $0x130] sm:$0xff]
    %v106 = vld [vmem:[#allocation5 + $0x138] sm:$0xff]
    %v107 = vld [vmem:[#allocation5 + $0x140] sm:$0xff]
    %v108 = vld [vmem:[#allocation5 + $0x148] sm:$0xff]
    %v109 = vld [vmem:[#allocation5 + $0x150] sm:$0xff]
    %v110 = vld [vmem:[#allocation5 + $0x158] sm:$0xff]
    %v111 = vld [vmem:[#allocation5 + $0x160] sm:$0xff]
    %v112 = vld [vmem:[#allocation5 + $0x168] sm:$0xff]
    %v113 = vld [vmem:[#allocation5 + $0x170] sm:$0xff]
    %v114 = vld [vmem:[#allocation5 + $0x178] sm:$0xff]
    %v115 = vld [vmem:[#allocation7] sm:$0x1]
    %v116 = vlaneseq
    %v117 = vshrl.u32 %v116, 7
    %v118 = vsub.s32 0, %v117
    %v119 = vrot.slane %v115, %v118
    %v132 = vunpack.c.l.b16 %v55
    %v133 = vunpack.c.h.b16 %v55
    %v134 = vunpack.c.l.b16 %v56
    %v135 = vunpack.c.h.b16 %v56
    %v136 = vunpack.c.l.b16 %v57
    %v137 = vunpack.c.h.b16 %v57
    %v138 = vunpack.c.l.b16 %v58
    %v139 = vunpack.c.h.b16 %v58
    %v140 = vunpack.c.l.b16 %v59
    %v141 = vunpack.c.h.b16 %v59
    %v142 = vunpack.c.l.b16 %v60
    %v143 = vunpack.c.h.b16 %v60
    %v144 = vunpack.c.l.b16 %v61
    %v145 = vunpack.c.h.b16 %v61
    %v146 = vunpack.c.l.b16 %v62
    %v147 = vunpack.c.h.b16 %v62
    %v148 = vunpack.c.l.b16 %v63
    %v149 = vunpack.c.h.b16 %v63
    %v150 = vunpack.c.l.b16 %v64
    %v151 = vunpack.c.h.b16 %v64
    %v152 = vunpack.c.l.b16 %v65
    %v153 = vunpack.c.h.b16 %v65
    %v154 = vunpack.c.l.b16 %v66
    %v155 = vunpack.c.h.b16 %v66
    %v156 = vpack.c.b16 %v132, %v132
    %v157 = vpack.c.b16 %v133, %v133
    %v158 = vpack.c.b16 %v134, %v134
    %v159 = vpack.c.b16 %v135, %v135
    %v160 = vpack.c.b16 %v136, %v136
    %v161 = vpack.c.b16 %v137, %v137
    %v162 = vpack.c.b16 %v138, %v138
    %v163 = vpack.c.b16 %v139, %v139
    %v164 = vpack.c.b16 %v140, %v140
    %v165 = vpack.c.b16 %v141, %v141
    %v166 = vpack.c.b16 %v142, %v142
    %v167 = vpack.c.b16 %v143, %v143
    %v168 = vpack.c.b16 %v144, %v144
    %v169 = vpack.c.b16 %v145, %v145
    %v170 = vpack.c.b16 %v146, %v146
    %v171 = vpack.c.b16 %v147, %v147
    %v172 = vpack.c.b16 %v148, %v148
    %v173 = vpack.c.b16 %v149, %v149
    %v174 = vpack.c.b16 %v150, %v150
    %v175 = vpack.c.b16 %v151, %v151
    %v176 = vpack.c.b16 %v152, %v152
    %v177 = vpack.c.b16 %v153, %v153
    %v178 = vpack.c.b16 %v154, %v154
    %v179 = vpack.c.b16 %v155, %v155
    %v252 = vunpack.c.l.b16 %v67
    %v253 = vunpack.c.h.b16 %v67
    %v254 = vunpack.c.l.b16 %v68
    %v255 = vunpack.c.h.b16 %v68
    %v256 = vunpack.c.l.b16 %v69
    %v257 = vunpack.c.h.b16 %v69
    %v258 = vunpack.c.l.b16 %v70
    %v259 = vunpack.c.h.b16 %v70
    %v260 = vunpack.c.l.b16 %v71
    %v261 = vunpack.c.h.b16 %v71
    %v262 = vunpack.c.l.b16 %v72
    %v263 = vunpack.c.h.b16 %v72
    %v264 = vunpack.c.l.b16 %v73
    %v265 = vunpack.c.h.b16 %v73
    %v266 = vunpack.c.l.b16 %v74
    %v267 = vunpack.c.h.b16 %v74
    %v268 = vunpack.c.l.b16 %v75
    %v269 = vunpack.c.h.b16 %v75
    %v270 = vunpack.c.l.b16 %v76
    %v271 = vunpack.c.h.b16 %v76
    %v272 = vunpack.c.l.b16 %v77
    %v273 = vunpack.c.h.b16 %v77
    %v274 = vunpack.c.l.b16 %v78
    %v275 = vunpack.c.h.b16 %v78
    %v276 = vunpack.c.l.b16 %v79
    %v277 = vunpack.c.h.b16 %v79
    %v278 = vunpack.c.l.b16 %v80
    %v279 = vunpack.c.h.b16 %v80
    %v280 = vunpack.c.l.b16 %v81
    %v281 = vunpack.c.h.b16 %v81
    %v282 = vunpack.c.l.b16 %v82
    %v283 = vunpack.c.h.b16 %v82
    %v284 = vunpack.c.l.b16 %v83
    %v285 = vunpack.c.h.b16 %v83
    %v286 = vunpack.c.l.b16 %v84
    %v287 = vunpack.c.h.b16 %v84
    %v288 = vunpack.c.l.b16 %v85
    %v289 = vunpack.c.h.b16 %v85
    %v290 = vunpack.c.l.b16 %v86
    %v291 = vunpack.c.h.b16 %v86
    %v292 = vunpack.c.l.b16 %v87
    %v293 = vunpack.c.h.b16 %v87
    %v294 = vunpack.c.l.b16 %v88
    %v295 = vunpack.c.h.b16 %v88
    %v296 = vunpack.c.l.b16 %v89
    %v297 = vunpack.c.h.b16 %v89
    %v298 = vunpack.c.l.b16 %v90
    %v299 = vunpack.c.h.b16 %v90
    %v300 = vunpack.c.l.b16 %v91
    %v301 = vunpack.c.h.b16 %v91
    %v302 = vunpack.c.l.b16 %v92
    %v303 = vunpack.c.h.b16 %v92
    %v304 = vunpack.c.l.b16 %v93
    %v305 = vunpack.c.h.b16 %v93
    %v306 = vunpack.c.l.b16 %v94
    %v307 = vunpack.c.h.b16 %v94
    %v308 = vunpack.c.l.b16 %v95
    %v309 = vunpack.c.h.b16 %v95
    %v310 = vunpack.c.l.b16 %v96
    %v311 = vunpack.c.h.b16 %v96
    %v312 = vunpack.c.l.b16 %v97
    %v313 = vunpack.c.h.b16 %v97
    %v314 = vunpack.c.l.b16 %v98
    %v315 = vunpack.c.h.b16 %v98
    %v316 = vunpack.c.l.b16 %v99
    %v317 = vunpack.c.h.b16 %v99
    %v318 = vunpack.c.l.b16 %v100
    %v319 = vunpack.c.h.b16 %v100
    %v320 = vunpack.c.l.b16 %v101
    %v321 = vunpack.c.h.b16 %v101
    %v322 = vunpack.c.l.b16 %v102
    %v323 = vunpack.c.h.b16 %v102
    %v324 = vunpack.c.l.b16 %v103
    %v325 = vunpack.c.h.b16 %v103
    %v326 = vunpack.c.l.b16 %v104
    %v327 = vunpack.c.h.b16 %v104
    %v328 = vunpack.c.l.b16 %v105
    %v329 = vunpack.c.h.b16 %v105
    %v330 = vunpack.c.l.b16 %v106
    %v331 = vunpack.c.h.b16 %v106
    %v332 = vunpack.c.l.b16 %v107
    %v333 = vunpack.c.h.b16 %v107
    %v334 = vunpack.c.l.b16 %v108
    %v335 = vunpack.c.h.b16 %v108
    %v336 = vunpack.c.l.b16 %v109
    %v337 = vunpack.c.h.b16 %v109
    %v338 = vunpack.c.l.b16 %v110
    %v339 = vunpack.c.h.b16 %v110
    %v340 = vunpack.c.l.b16 %v111
    %v341 = vunpack.c.h.b16 %v111
    %v342 = vunpack.c.l.b16 %v112
    %v343 = vunpack.c.h.b16 %v112
    %v344 = vunpack.c.l.b16 %v113
    %v345 = vunpack.c.h.b16 %v113
    %v346 = vunpack.c.l.b16 %v114
    %v347 = vunpack.c.h.b16 %v114
    %v348 = vpack.c.b16 %v276, %v252
    %v349 = vpack.c.b16 %v277, %v253
    %v350 = vpack.c.b16 %v278, %v254
    %v351 = vpack.c.b16 %v279, %v255
    %v352 = vpack.c.b16 %v280, %v256
    %v353 = vpack.c.b16 %v281, %v257
    %v354 = vpack.c.b16 %v282, %v258
    %v355 = vpack.c.b16 %v283, %v259
    %v356 = vpack.c.b16 %v284, %v260
    %v357 = vpack.c.b16 %v285, %v261
    %v358 = vpack.c.b16 %v286, %v262
    %v359 = vpack.c.b16 %v287, %v263
    %v360 = vpack.c.b16 %v288, %v264
    %v361 = vpack.c.b16 %v289, %v265
    %v362 = vpack.c.b16 %v290, %v266
    %v363 = vpack.c.b16 %v291, %v267
    %v364 = vpack.c.b16 %v292, %v268
    %v365 = vpack.c.b16 %v293, %v269
    %v366 = vpack.c.b16 %v294, %v270
    %v367 = vpack.c.b16 %v295, %v271
    %v368 = vpack.c.b16 %v296, %v272
    %v369 = vpack.c.b16 %v297, %v273
    %v370 = vpack.c.b16 %v298, %v274
    %v371 = vpack.c.b16 %v299, %v275
    %v372 = vpack.c.b16 %v324, %v300
    %v373 = vpack.c.b16 %v325, %v301
    %v374 = vpack.c.b16 %v326, %v302
    %v375 = vpack.c.b16 %v327, %v303
    %v376 = vpack.c.b16 %v328, %v304
    %v377 = vpack.c.b16 %v329, %v305
    %v378 = vpack.c.b16 %v330, %v306
    %v379 = vpack.c.b16 %v331, %v307
    %v380 = vpack.c.b16 %v332, %v308
    %v381 = vpack.c.b16 %v333, %v309
    %v382 = vpack.c.b16 %v334, %v310
    %v383 = vpack.c.b16 %v335, %v311
    %v384 = vpack.c.b16 %v336, %v312
    %v385 = vpack.c.b16 %v337, %v313
    %v386 = vpack.c.b16 %v338, %v314
    %v387 = vpack.c.b16 %v339, %v315
    %v388 = vpack.c.b16 %v340, %v316
    %v389 = vpack.c.b16 %v341, %v317
    %v390 = vpack.c.b16 %v342, %v318
    %v391 = vpack.c.b16 %v343, %v319
    %v392 = vpack.c.b16 %v344, %v320
    %v393 = vpack.c.b16 %v345, %v321
    %v394 = vpack.c.b16 %v346, %v322
    %v395 = vpack.c.b16 %v347, %v323
    %444 = vmatprep.subr.bf16.mxu0 %v349
    %445 = vmatpush1.bf16.xpose.msra.mxu0 %v348
    %446 = vmatprep.subr.bf16.mxu0 %v373
    %447 = vmatpush1.bf16.xpose.msra.mxu0 %v372
    %448 = vmatprep.subr.bf16.mxu0 0
    %449 = vmatpush1.bf16.xpose.msra.mxu0 0
    %450 = vmatprep.subr.bf16.mxu0 0
    %451 = vmatpush1.bf16.xpose.msra.mxu0 0
    %452 = vmatprep.subr.bf16.mxu0 0
    %453 = vmatpush1.bf16.xpose.msra.mxu0 0
    %454 = vmatprep.subr.bf16.mxu0 0
    %455 = vmatpush1.bf16.xpose.msra.mxu0 0
    %456 = vmatprep.subr.bf16.mxu0 0
    %457 = vmatpush1.bf16.xpose.msra.mxu0 0
    %458 = vmatprep.subr.bf16.mxu0 0
    %459 = vmatpush1.bf16.xpose.msra.mxu0 0
    %460 = vmatprep.subr.bf16.mxu0 0
    %461 = vmatpush1.bf16.xpose.msra.mxu0 0
    %462 = vmatprep.subr.bf16.mxu0 0
    %463 = vmatpush1.bf16.xpose.msra.mxu0 0
    %464 = vmatprep.subr.bf16.mxu0 0
    %465 = vmatpush1.bf16.xpose.msra.mxu0 0
    %466 = vmatprep.subr.bf16.mxu0 0
    %467 = vmatpush1.bf16.xpose.msra.mxu0 0
    %468 = vmatprep.subr.bf16.mxu0 0
    %469 = vmatpush1.bf16.xpose.msra.mxu0 0
    %470 = vmatprep.subr.bf16.mxu0 0
    %471 = vmatpush1.bf16.xpose.msra.mxu0 0
    %472 = vmatprep.subr.bf16.mxu0 0
    %473 = vmatpush1.bf16.xpose.msra.mxu0 0
    %474 = vmatprep.subr.bf16.mxu0 0
    %475 = vmatpush1.bf16.xpose.msra.mxu0 0
    %476 = vmatprep.mubr.bf16.mxu0 %v157
    %477 = vmatmul.mubr.bf16.gmra.mrb[0].mxu0 %v156
    %v478 = vpop.f32.mrb[0].mxu0
    %v479 = vadd.f32 %v119, %v478
    %v480 = vpop.f32.mrb[0].mxu0
    %v481 = vpop.f32.mrb[0].mxu0
    %v482 = vpop.f32.mrb[0].mxu0
    %483 = vdwg.mxu0
    %484 = vmatprep.subr.bf16.mxu0 %v351
    %485 = vmatpush1.bf16.xpose.msra.mxu0 %v350
    %486 = vmatprep.subr.bf16.mxu0 %v375
    %487 = vmatpush1.bf16.xpose.msra.mxu0 %v374
    %488 = vmatprep.subr.bf16.mxu0 0
    %489 = vmatpush1.bf16.xpose.msra.mxu0 0
    %490 = vmatprep.subr.bf16.mxu0 0
    %491 = vmatpush1.bf16.xpose.msra.mxu0 0
    %492 = vmatprep.subr.bf16.mxu0 0
    %493 = vmatpush1.bf16.xpose.msra.mxu0 0
    %494 = vmatprep.subr.bf16.mxu0 0
    %495 = vmatpush1.bf16.xpose.msra.mxu0 0
    %496 = vmatprep.subr.bf16.mxu0 0
    %497 = vmatpush1.bf16.xpose.msra.mxu0 0
    %498 = vmatprep.subr.bf16.mxu0 0
    %499 = vmatpush1.bf16.xpose.msra.mxu0 0
    %500 = vmatprep.subr.bf16.mxu0 0
    %501 = vmatpush1.bf16.xpose.msra.mxu0 0
    %502 = vmatprep.subr.bf16.mxu0 0
    %503 = vmatpush1.bf16.xpose.msra.mxu0 0
    %504 = vmatprep.subr.bf16.mxu0 0
    %505 = vmatpush1.bf16.xpose.msra.mxu0 0
    %506 = vmatprep.subr.bf16.mxu0 0
    %507 = vmatpush1.bf16.xpose.msra.mxu0 0
    %508 = vmatprep.subr.bf16.mxu0 0
    %509 = vmatpush1.bf16.xpose.msra.mxu0 0
    %510 = vmatprep.subr.bf16.mxu0 0
    %511 = vmatpush1.bf16.xpose.msra.mxu0 0
    %512 = vmatprep.subr.bf16.mxu0 0
    %513 = vmatpush1.bf16.xpose.msra.mxu0 0
    %514 = vmatprep.subr.bf16.mxu0 0
    %515 = vmatpush1.bf16.xpose.msra.mxu0 0
    %516 = vmatprep.mubr.bf16.mxu0 %v159
    %517 = vmatmul.mubr.bf16.gmra.mrb[0].mxu0 %v158
    %v518 = vpop.f32.mrb[0].mxu0
    %v519 = vadd.f32 %v479, %v518
    %v520 = vpop.f32.mrb[0].mxu0
    %v521 = vpop.f32.mrb[0].mxu0
    %v522 = vpop.f32.mrb[0].mxu0
    %523 = vdwg.mxu0
    %524 = vmatprep.subr.bf16.mxu0 %v353
    %525 = vmatpush1.bf16.xpose.msra.mxu0 %v352
    %526 = vmatprep.subr.bf16.mxu0 %v377
    %527 = vmatpush1.bf16.xpose.msra.mxu0 %v376
    %528 = vmatprep.subr.bf16.mxu0 0
    %529 = vmatpush1.bf16.xpose.msra.mxu0 0
    %530 = vmatprep.subr.bf16.mxu0 0
    %531 = vmatpush1.bf16.xpose.msra.mxu0 0
    %532 = vmatprep.subr.bf16.mxu0 0
    %533 = vmatpush1.bf16.xpose.msra.mxu0 0
    %534 = vmatprep.subr.bf16.mxu0 0
    %535 = vmatpush1.bf16.xpose.msra.mxu0 0
    %536 = vmatprep.subr.bf16.mxu0 0
    %537 = vmatpush1.bf16.xpose.msra.mxu0 0
    %538 = vmatprep.subr.bf16.mxu0 0
    %539 = vmatpush1.bf16.xpose.msra.mxu0 0
    %540 = vmatprep.subr.bf16.mxu0 0
    %541 = vmatpush1.bf16.xpose.msra.mxu0 0
    %542 = vmatprep.subr.bf16.mxu0 0
    %543 = vmatpush1.bf16.xpose.msra.mxu0 0
    %544 = vmatprep.subr.bf16.mxu0 0
    %545 = vmatpush1.bf16.xpose.msra.mxu0 0
    %546 = vmatprep.subr.bf16.mxu0 0
    %547 = vmatpush1.bf16.xpose.msra.mxu0 0
    %548 = vmatprep.subr.bf16.mxu0 0
    %549 = vmatpush1.bf16.xpose.msra.mxu0 0
    %550 = vmatprep.subr.bf16.mxu0 0
    %551 = vmatpush1.bf16.xpose.msra.mxu0 0
    %552 = vmatprep.subr.bf16.mxu0 0
    %553 = vmatpush1.bf16.xpose.msra.mxu0 0
    %554 = vmatprep.subr.bf16.mxu0 0
    %555 = vmatpush1.bf16.xpose.msra.mxu0 0
    %556 = vmatprep.mubr.bf16.mxu0 %v161
    %557 = vmatmul.mubr.bf16.gmra.mrb[0].mxu0 %v160
    %v558 = vpop.f32.mrb[0].mxu0
    %v559 = vadd.f32 %v519, %v558
    %v560 = vpop.f32.mrb[0].mxu0
    %v561 = vpop.f32.mrb[0].mxu0
    %v562 = vpop.f32.mrb[0].mxu0
    %563 = vdwg.mxu0
    %564 = vmatprep.subr.bf16.mxu0 %v355
    %565 = vmatpush1.bf16.xpose.msra.mxu0 %v354
    %566 = vmatprep.subr.bf16.mxu0 %v379
    %567 = vmatpush1.bf16.xpose.msra.mxu0 %v378
    %568 = vmatprep.subr.bf16.mxu0 0
    %569 = vmatpush1.bf16.xpose.msra.mxu0 0
    %570 = vmatprep.subr.bf16.mxu0 0
    %571 = vmatpush1.bf16.xpose.msra.mxu0 0
    %572 = vmatprep.subr.bf16.mxu0 0
    %573 = vmatpush1.bf16.xpose.msra.mxu0 0
    %574 = vmatprep.subr.bf16.mxu0 0
    %575 = vmatpush1.bf16.xpose.msra.mxu0 0
    %576 = vmatprep.subr.bf16.mxu0 0
    %577 = vmatpush1.bf16.xpose.msra.mxu0 0
    %578 = vmatprep.subr.bf16.mxu0 0
    %579 = vmatpush1.bf16.xpose.msra.mxu0 0
    %580 = vmatprep.subr.bf16.mxu0 0
    %581 = vmatpush1.bf16.xpose.msra.mxu0 0
    %582 = vmatprep.subr.bf16.mxu0 0
    %583 = vmatpush1.bf16.xpose.msra.mxu0 0
    %584 = vmatprep.subr.bf16.mxu0 0
    %585 = vmatpush1.bf16.xpose.msra.mxu0 0
    %586 = vmatprep.subr.bf16.mxu0 0
    %587 = vmatpush1.bf16.xpose.msra.mxu0 0
    %588 = vmatprep.subr.bf16.mxu0 0
    %589 = vmatpush1.bf16.xpose.msra.mxu0 0
    %590 = vmatprep.subr.bf16.mxu0 0
    %591 = vmatpush1.bf16.xpose.msra.mxu0 0
    %592 = vmatprep.subr.bf16.mxu0 0
    %593 = vmatpush1.bf16.xpose.msra.mxu0 0
    %594 = vmatprep.subr.bf16.mxu0 0
    %595 = vmatpush1.bf16.xpose.msra.mxu0 0
    %596 = vmatprep.mubr.bf16.mxu0 %v163
    %597 = vmatmul.mubr.bf16.gmra.mrb[0].mxu0 %v162
    %v598 = vpop.f32.mrb[0].mxu0
    %v599 = vadd.f32 %v559, %v598
    %v600 = vpop.f32.mrb[0].mxu0
    %v601 = vpop.f32.mrb[0].mxu0
    %v602 = vpop.f32.mrb[0].mxu0
    %603 = vdwg.mxu0
    %604 = vmatprep.subr.bf16.mxu0 %v357
    %605 = vmatpush1.bf16.xpose.msra.mxu0 %v356
    %606 = vmatprep.subr.bf16.mxu0 %v381
    %607 = vmatpush1.bf16.xpose.msra.mxu0 %v380
    %608 = vmatprep.subr.bf16.mxu0 0
    %609 = vmatpush1.bf16.xpose.msra.mxu0 0
    %610 = vmatprep.subr.bf16.mxu0 0
    %611 = vmatpush1.bf16.xpose.msra.mxu0 0
    %612 = vmatprep.subr.bf16.mxu0 0
    %613 = vmatpush1.bf16.xpose.msra.mxu0 0
    %614 = vmatprep.subr.bf16.mxu0 0
    %615 = vmatpush1.bf16.xpose.msra.mxu0 0
    %616 = vmatprep.subr.bf16.mxu0 0
    %617 = vmatpush1.bf16.xpose.msra.mxu0 0
    %618 = vmatprep.subr.bf16.mxu0 0
    %619 = vmatpush1.bf16.xpose.msra.mxu0 0
    %620 = vmatprep.subr.bf16.mxu0 0
    %621 = vmatpush1.bf16.xpose.msra.mxu0 0
    %622 = vmatprep.subr.bf16.mxu0 0
    %623 = vmatpush1.bf16.xpose.msra.mxu0 0
    %624 = vmatprep.subr.bf16.mxu0 0
    %625 = vmatpush1.bf16.xpose.msra.mxu0 0
    %626 = vmatprep.subr.bf16.mxu0 0
    %627 = vmatpush1.bf16.xpose.msra.mxu0 0
    %628 = vmatprep.subr.bf16.mxu0 0
    %629 = vmatpush1.bf16.xpose.msra.mxu0 0
    %630 = vmatprep.subr.bf16.mxu0 0
    %631 = vmatpush1.bf16.xpose.msra.mxu0 0
    %632 = vmatprep.subr.bf16.mxu0 0
    %633 = vmatpush1.bf16.xpose.msra.mxu0 0
    %634 = vmatprep.subr.bf16.mxu0 0
    %635 = vmatpush1.bf16.xpose.msra.mxu0 0
    %636 = vmatprep.mubr.bf16.mxu0 %v165
    %637 = vmatmul.mubr.bf16.gmra.mrb[0].mxu0 %v164
    %v638 = vpop.f32.mrb[0].mxu0
    %v639 = vadd.f32 %v599, %v638
    %v640 = vpop.f32.mrb[0].mxu0
    %v641 = vpop.f32.mrb[0].mxu0
    %v642 = vpop.f32.mrb[0].mxu0
    %643 = vdwg.mxu0
    %644 = vmatprep.subr.bf16.mxu0 %v359
    %645 = vmatpush1.bf16.xpose.msra.mxu0 %v358
    %646 = vmatprep.subr.bf16.mxu0 %v383
    %647 = vmatpush1.bf16.xpose.msra.mxu0 %v382
    %648 = vmatprep.subr.bf16.mxu0 0
    %649 = vmatpush1.bf16.xpose.msra.mxu0 0
    %650 = vmatprep.subr.bf16.mxu0 0
    %651 = vmatpush1.bf16.xpose.msra.mxu0 0
    %652 = vmatprep.subr.bf16.mxu0 0
    %653 = vmatpush1.bf16.xpose.msra.mxu0 0
    %654 = vmatprep.subr.bf16.mxu0 0
    %655 = vmatpush1.bf16.xpose.msra.mxu0 0
    %656 = vmatprep.subr.bf16.mxu0 0
    %657 = vmatpush1.bf16.xpose.msra.mxu0 0
    %658 = vmatprep.subr.bf16.mxu0 0
    %659 = vmatpush1.bf16.xpose.msra.mxu0 0
    %660 = vmatprep.subr.bf16.mxu0 0
    %661 = vmatpush1.bf16.xpose.msra.mxu0 0
    %662 = vmatprep.subr.bf16.mxu0 0
    %663 = vmatpush1.bf16.xpose.msra.mxu0 0
    %664 = vmatprep.subr.bf16.mxu0 0
    %665 = vmatpush1.bf16.xpose.msra.mxu0 0
    %666 = vmatprep.subr.bf16.mxu0 0
    %667 = vmatpush1.bf16.xpose.msra.mxu0 0
    %668 = vmatprep.subr.bf16.mxu0 0
    %669 = vmatpush1.bf16.xpose.msra.mxu0 0
    %670 = vmatprep.subr.bf16.mxu0 0
    %671 = vmatpush1.bf16.xpose.msra.mxu0 0
    %672 = vmatprep.subr.bf16.mxu0 0
    %673 = vmatpush1.bf16.xpose.msra.mxu0 0
    %674 = vmatprep.subr.bf16.mxu0 0
    %675 = vmatpush1.bf16.xpose.msra.mxu0 0
    %676 = vmatprep.mubr.bf16.mxu0 %v167
    %677 = vmatmul.mubr.bf16.gmra.mrb[0].mxu0 %v166
    %v678 = vpop.f32.mrb[0].mxu0
    %v679 = vadd.f32 %v639, %v678
    %v680 = vpop.f32.mrb[0].mxu0
    %v681 = vpop.f32.mrb[0].mxu0
    %v682 = vpop.f32.mrb[0].mxu0
    %683 = vdwg.mxu0
    %684 = vmatprep.subr.bf16.mxu0 %v361
    %685 = vmatpush1.bf16.xpose.msra.mxu0 %v360
    %686 = vmatprep.subr.bf16.mxu0 %v385
    %687 = vmatpush1.bf16.xpose.msra.mxu0 %v384
    %688 = vmatprep.subr.bf16.mxu0 0
    %689 = vmatpush1.bf16.xpose.msra.mxu0 0
    %690 = vmatprep.subr.bf16.mxu0 0
    %691 = vmatpush1.bf16.xpose.msra.mxu0 0
    %692 = vmatprep.subr.bf16.mxu0 0
    %693 = vmatpush1.bf16.xpose.msra.mxu0 0
    %694 = vmatprep.subr.bf16.mxu0 0
    %695 = vmatpush1.bf16.xpose.msra.mxu0 0
    %696 = vmatprep.subr.bf16.mxu0 0
    %697 = vmatpush1.bf16.xpose.msra.mxu0 0
    %698 = vmatprep.subr.bf16.mxu0 0
    %699 = vmatpush1.bf16.xpose.msra.mxu0 0
    %700 = vmatprep.subr.bf16.mxu0 0
    %701 = vmatpush1.bf16.xpose.msra.mxu0 0
    %702 = vmatprep.subr.bf16.mxu0 0
    %703 = vmatpush1.bf16.xpose.msra.mxu0 0
    %704 = vmatprep.subr.bf16.mxu0 0
    %705 = vmatpush1.bf16.xpose.msra.mxu0 0
    %706 = vmatprep.subr.bf16.mxu0 0
    %707 = vmatpush1.bf16.xpose.msra.mxu0 0
    %708 = vmatprep.subr.bf16.mxu0 0
    %709 = vmatpush1.bf16.xpose.msra.mxu0 0
    %710 = vmatprep.subr.bf16.mxu0 0
    %711 = vmatpush1.bf16.xpose.msra.mxu0 0
    %712 = vmatprep.subr.bf16.mxu0 0
    %713 = vmatpush1.bf16.xpose.msra.mxu0 0
    %714 = vmatprep.subr.bf16.mxu0 0
    %715 = vmatpush1.bf16.xpose.msra.mxu0 0
    %716 = vmatprep.mubr.bf16.mxu0 %v169
    %717 = vmatmul.mubr.bf16.gmra.mrb[0].mxu0 %v168
    %v718 = vpop.f32.mrb[0].mxu0
    %v719 = vadd.f32 %v679, %v718
    %v720 = vpop.f32.mrb[0].mxu0
    %v721 = vpop.f32.mrb[0].mxu0
    %v722 = vpop.f32.mrb[0].mxu0
    %723 = vdwg.mxu0
    %724 = vmatprep.subr.bf16.mxu0 %v363
    %725 = vmatpush1.bf16.xpose.msra.mxu0 %v362
    %726 = vmatprep.subr.bf16.mxu0 %v387
    %727 = vmatpush1.bf16.xpose.msra.mxu0 %v386
    %728 = vmatprep.subr.bf16.mxu0 0
    %729 = vmatpush1.bf16.xpose.msra.mxu0 0
    %730 = vmatprep.subr.bf16.mxu0 0
    %731 = vmatpush1.bf16.xpose.msra.mxu0 0
    %732 = vmatprep.subr.bf16.mxu0 0
    %733 = vmatpush1.bf16.xpose.msra.mxu0 0
    %734 = vmatprep.subr.bf16.mxu0 0
    %735 = vmatpush1.bf16.xpose.msra.mxu0 0
    %736 = vmatprep.subr.bf16.mxu0 0
    %737 = vmatpush1.bf16.xpose.msra.mxu0 0
    %738 = vmatprep.subr.bf16.mxu0 0
    %739 = vmatpush1.bf16.xpose.msra.mxu0 0
    %740 = vmatprep.subr.bf16.mxu0 0
    %741 = vmatpush1.bf16.xpose.msra.mxu0 0
    %742 = vmatprep.subr.bf16.mxu0 0
    %743 = vmatpush1.bf16.xpose.msra.mxu0 0
    %744 = vmatprep.subr.bf16.mxu0 0
    %745 = vmatpush1.bf16.xpose.msra.mxu0 0
    %746 = vmatprep.subr.bf16.mxu0 0
    %747 = vmatpush1.bf16.xpose.msra.mxu0 0
    %748 = vmatprep.subr.bf16.mxu0 0
    %749 = vmatpush1.bf16.xpose.msra.mxu0 0
    %750 = vmatprep.subr.bf16.mxu0 0
    %751 = vmatpush1.bf16.xpose.msra.mxu0 0
    %752 = vmatprep.subr.bf16.mxu0 0
    %753 = vmatpush1.bf16.xpose.msra.mxu0 0
    %754 = vmatprep.subr.bf16.mxu0 0
    %755 = vmatpush1.bf16.xpose.msra.mxu0 0
    %756 = vmatprep.mubr.bf16.mxu0 %v171
    %757 = vmatmul.mubr.bf16.gmra.mrb[0].mxu0 %v170
    %v758 = vpop.f32.mrb[0].mxu0
    %v759 = vadd.f32 %v719, %v758
    %v760 = vpop.f32.mrb[0].mxu0
    %v761 = vpop.f32.mrb[0].mxu0
    %v762 = vpop.f32.mrb[0].mxu0
    %763 = vdwg.mxu0
    %764 = vmatprep.subr.bf16.mxu0 %v365
    %765 = vmatpush1.bf16.xpose.msra.mxu0 %v364
    %766 = vmatprep.subr.bf16.mxu0 %v389
    %767 = vmatpush1.bf16.xpose.msra.mxu0 %v388
    %768 = vmatprep.subr.bf16.mxu0 0
    %769 = vmatpush1.bf16.xpose.msra.mxu0 0
    %770 = vmatprep.subr.bf16.mxu0 0
    %771 = vmatpush1.bf16.xpose.msra.mxu0 0
    %772 = vmatprep.subr.bf16.mxu0 0
    %773 = vmatpush1.bf16.xpose.msra.mxu0 0
    %774 = vmatprep.subr.bf16.mxu0 0
    %775 = vmatpush1.bf16.xpose.msra.mxu0 0
    %776 = vmatprep.subr.bf16.mxu0 0
    %777 = vmatpush1.bf16.xpose.msra.mxu0 0
    %778 = vmatprep.subr.bf16.mxu0 0
    %779 = vmatpush1.bf16.xpose.msra.mxu0 0
    %780 = vmatprep.subr.bf16.mxu0 0
    %781 = vmatpush1.bf16.xpose.msra.mxu0 0
    %782 = vmatprep.subr.bf16.mxu0 0
    %783 = vmatpush1.bf16.xpose.msra.mxu0 0
    %784 = vmatprep.subr.bf16.mxu0 0
    %785 = vmatpush1.bf16.xpose.msra.mxu0 0
    %786 = vmatprep.subr.bf16.mxu0 0
    %787 = vmatpush1.bf16.xpose.msra.mxu0 0
    %788 = vmatprep.subr.bf16.mxu0 0
    %789 = vmatpush1.bf16.xpose.msra.mxu0 0
    %790 = vmatprep.subr.bf16.mxu0 0
    %791 = vmatpush1.bf16.xpose.msra.mxu0 0
    %792 = vmatprep.subr.bf16.mxu0 0
    %793 = vmatpush1.bf16.xpose.msra.mxu0 0
    %794 = vmatprep.subr.bf16.mxu0 0
    %795 = vmatpush1.bf16.xpose.msra.mxu0 0
    %796 = vmatprep.mubr.bf16.mxu0 %v173
    %797 = vmatmul.mubr.bf16.gmra.mrb[0].mxu0 %v172
    %v798 = vpop.f32.mrb[0].mxu0
    %v799 = vadd.f32 %v759, %v798
    %v800 = vpop.f32.mrb[0].mxu0
    %v801 = vpop.f32.mrb[0].mxu0
    %v802 = vpop.f32.mrb[0].mxu0
    %803 = vdwg.mxu0
    %804 = vmatprep.subr.bf16.mxu0 %v367
    %805 = vmatpush1.bf16.xpose.msra.mxu0 %v366
    %806 = vmatprep.subr.bf16.mxu0 %v391
    %807 = vmatpush1.bf16.xpose.msra.mxu0 %v390
    %808 = vmatprep.subr.bf16.mxu0 0
    %809 = vmatpush1.bf16.xpose.msra.mxu0 0
    %810 = vmatprep.subr.bf16.mxu0 0
    %811 = vmatpush1.bf16.xpose.msra.mxu0 0
    %812 = vmatprep.subr.bf16.mxu0 0
    %813 = vmatpush1.bf16.xpose.msra.mxu0 0
    %814 = vmatprep.subr.bf16.mxu0 0
    %815 = vmatpush1.bf16.xpose.msra.mxu0 0
    %816 = vmatprep.subr.bf16.mxu0 0
    %817 = vmatpush1.bf16.xpose.msra.mxu0 0
    %818 = vmatprep.subr.bf16.mxu0 0
    %819 = vmatpush1.bf16.xpose.msra.mxu0 0
    %820 = vmatprep.subr.bf16.mxu0 0
    %821 = vmatpush1.bf16.xpose.msra.mxu0 0
    %822 = vmatprep.subr.bf16.mxu0 0
    %823 = vmatpush1.bf16.xpose.msra.mxu0 0
    %824 = vmatprep.subr.bf16.mxu0 0
    %825 = vmatpush1.bf16.xpose.msra.mxu0 0
    %826 = vmatprep.subr.bf16.mxu0 0
    %827 = vmatpush1.bf16.xpose.msra.mxu0 0
    %828 = vmatprep.subr.bf16.mxu0 0
    %829 = vmatpush1.bf16.xpose.msra.mxu0 0
    %830 = vmatprep.subr.bf16.mxu0 0
    %831 = vmatpush1.bf16.xpose.msra.mxu0 0
    %832 = vmatprep.subr.bf16.mxu0 0
    %833 = vmatpush1.bf16.xpose.msra.mxu0 0
    %834 = vmatprep.subr.bf16.mxu0 0
    %835 = vmatpush1.bf16.xpose.msra.mxu0 0
    %836 = vmatprep.mubr.bf16.mxu0 %v175
    %837 = vmatmul.mubr.bf16.gmra.mrb[0].mxu0 %v174
    %v838 = vpop.f32.mrb[0].mxu0
    %v839 = vadd.f32 %v799, %v838
    %v840 = vpop.f32.mrb[0].mxu0
    %v841 = vpop.f32.mrb[0].mxu0
    %v842 = vpop.f32.mrb[0].mxu0
    %843 = vdwg.mxu0
    %844 = vmatprep.subr.bf16.mxu0 %v369
    %845 = vmatpush1.bf16.xpose.msra.mxu0 %v368
    %846 = vmatprep.subr.bf16.mxu0 %v393
    %847 = vmatpush1.bf16.xpose.msra.mxu0 %v392
    %848 = vmatprep.subr.bf16.mxu0 0
    %849 = vmatpush1.bf16.xpose.msra.mxu0 0
    %850 = vmatprep.subr.bf16.mxu0 0
    %851 = vmatpush1.bf16.xpose.msra.mxu0 0
    %852 = vmatprep.subr.bf16.mxu0 0
    %853 = vmatpush1.bf16.xpose.msra.mxu0 0
    %854 = vmatprep.subr.bf16.mxu0 0
    %855 = vmatpush1.bf16.xpose.msra.mxu0 0
    %856 = vmatprep.subr.bf16.mxu0 0
    %857 = vmatpush1.bf16.xpose.msra.mxu0 0
    %858 = vmatprep.subr.bf16.mxu0 0
    %859 = vmatpush1.bf16.xpose.msra.mxu0 0
    %860 = vmatprep.subr.bf16.mxu0 0
    %861 = vmatpush1.bf16.xpose.msra.mxu0 0
    %862 = vmatprep.subr.bf16.mxu0 0
    %863 = vmatpush1.bf16.xpose.msra.mxu0 0
    %864 = vmatprep.subr.bf16.mxu0 0
    %865 = vmatpush1.bf16.xpose.msra.mxu0 0
    %866 = vmatprep.subr.bf16.mxu0 0
    %867 = vmatpush1.bf16.xpose.msra.mxu0 0
    %868 = vmatprep.subr.bf16.mxu0 0
    %869 = vmatpush1.bf16.xpose.msra.mxu0 0
    %870 = vmatprep.subr.bf16.mxu0 0
    %871 = vmatpush1.bf16.xpose.msra.mxu0 0
    %872 = vmatprep.subr.bf16.mxu0 0
    %873 = vmatpush1.bf16.xpose.msra.mxu0 0
    %874 = vmatprep.subr.bf16.mxu0 0
    %875 = vmatpush1.bf16.xpose.msra.mxu0 0
    %876 = vmatprep.mubr.bf16.mxu0 %v177
    %877 = vmatmul.mubr.bf16.gmra.mrb[0].mxu0 %v176
    %v878 = vpop.f32.mrb[0].mxu0
    %v879 = vadd.f32 %v839, %v878
    %v880 = vpop.f32.mrb[0].mxu0
    %v881 = vpop.f32.mrb[0].mxu0
    %v882 = vpop.f32.mrb[0].mxu0
    %883 = vdwg.mxu0
    %884 = vmatprep.subr.bf16.mxu0 %v371
    %885 = vmatpush1.bf16.xpose.msra.mxu0 %v370
    %886 = vmatprep.subr.bf16.mxu0 %v395
    %887 = vmatpush1.bf16.xpose.msra.mxu0 %v394
    %888 = vmatprep.subr.bf16.mxu0 0
    %889 = vmatpush1.bf16.xpose.msra.mxu0 0
    %890 = vmatprep.subr.bf16.mxu0 0
    %891 = vmatpush1.bf16.xpose.msra.mxu0 0
    %892 = vmatprep.subr.bf16.mxu0 0
    %893 = vmatpush1.bf16.xpose.msra.mxu0 0
    %894 = vmatprep.subr.bf16.mxu0 0
    %895 = vmatpush1.bf16.xpose.msra.mxu0 0
    %896 = vmatprep.subr.bf16.mxu0 0
    %897 = vmatpush1.bf16.xpose.msra.mxu0 0
    %898 = vmatprep.subr.bf16.mxu0 0
    %899 = vmatpush1.bf16.xpose.msra.mxu0 0
    %900 = vmatprep.subr.bf16.mxu0 0
    %901 = vmatpush1.bf16.xpose.msra.mxu0 0
    %902 = vmatprep.subr.bf16.mxu0 0
    %903 = vmatpush1.bf16.xpose.msra.mxu0 0
    %904 = vmatprep.subr.bf16.mxu0 0
    %905 = vmatpush1.bf16.xpose.msra.mxu0 0
    %906 = vmatprep.subr.bf16.mxu0 0
    %907 = vmatpush1.bf16.xpose.msra.mxu0 0
    %908 = vmatprep.subr.bf16.mxu0 0
    %909 = vmatpush1.bf16.xpose.msra.mxu0 0
    %910 = vmatprep.subr.bf16.mxu0 0
    %911 = vmatpush1.bf16.xpose.msra.mxu0 0
    %912 = vmatprep.subr.bf16.mxu0 0
    %913 = vmatpush1.bf16.xpose.msra.mxu0 0
    %914 = vmatprep.subr.bf16.mxu0 0
    %915 = vmatpush1.bf16.xpose.msra.mxu0 0
    %916 = vmatprep.mubr.bf16.mxu0 %v179
    %917 = vmatmul.mubr.bf16.gmra.mrb[0].mxu0 %v178
    %v918 = vpop.f32.mrb[0].mxu0
    %v919 = vadd.f32 %v879, %v918
    %v920 = vpop.f32.mrb[0].mxu0
    %v921 = vpop.f32.mrb[0].mxu0
    %v922 = vpop.f32.mrb[0].mxu0
    %923 = vdwg.mxu0
    %v924 = vmul.f32 %v919, 0.5
    %v925 = vmul.f32 %v919, 0.70710677
    %v926 = verf.f32.pop %v925
    %v927 = vadd.f32 %v926, 1.0
    %v928 = vmul.f32 %v924, %v927
    %v929 = vld [vmem:[#allocation7 + $0x8] sm:$0xff]
    %v930 = vld [vmem:[#allocation7 + $0x10] sm:$0xff]
    %v931 = vld [vmem:[#allocation7 + $0x18] sm:$0xff]
    %v932 = vld [vmem:[#allocation7 + $0x20] sm:$0xff]
    %v933 = vld [vmem:[#allocation7 + $0x28] sm:$0x1]
    %v934 = vlaneseq
    %v935 = vshrl.u32 %v934, 7
    %v936 = vsub.s32 0, %v935
    %v937 = vrot.slane %v933, %v936
    %vm938 = vcmask 261120
    %v940 = vsel %vm938, %v928, 0
    %942 = vmatprep.subr.mxu0 0.0
    %943 = vmatpush1.msra.mxu0 %v929
    %944 = vmatprep.subr.mxu0 0.0
    %945 = vmatpush1.msra.mxu0 %v930
    %946 = vmatprep.subr.mxu0 0.0
    %947 = vmatpush1.msra.mxu0 %v931
    %948 = vmatprep.subr.mxu0 0.0
    %949 = vmatpush1.msra.mxu0 %v932
    %950 = vmatprep.subr.mxu0 0.0
    %951 = vmatpush1.msra.mxu0 0.0
    %952 = vmatprep.subr.mxu0 0.0
    %953 = vmatpush1.msra.mxu0 0.0
    %954 = vmatprep.subr.mxu0 0.0
    %955 = vmatpush1.msra.mxu0 0.0
    %956 = vmatprep.subr.mxu0 0.0
    %957 = vmatpush1.msra.mxu0 0.0
    %958 = vmatprep.subr.mxu0 0.0
    %959 = vmatpush1.msra.mxu0 0.0
    %960 = vmatprep.subr.mxu0 0.0
    %961 = vmatpush1.msra.mxu0 0.0
    %962 = vmatprep.subr.mxu0 0.0
    %963 = vmatpush1.msra.mxu0 0.0
    %964 = vmatprep.subr.mxu0 0.0
    %965 = vmatpush1.msra.mxu0 0.0
    %966 = vmatprep.subr.mxu0 0.0
    %967 = vmatpush1.msra.mxu0 0.0
    %968 = vmatprep.subr.mxu0 0.0
    %969 = vmatpush1.msra.mxu0 0.0
    %970 = vmatprep.subr.mxu0 0.0
    %971 = vmatpush1.msra.mxu0 0.0
    %972 = vmatprep.subr.mxu0 0.0
    %973 = vmatpush1.msra.mxu0 0.0
    %974 = vmatprep.subr.mxu0 0.0
    %975 = vmatpush1.msra.mxu0 0.0
    %976 = vmatprep.subr.mxu0 0.0
    %977 = vmatpush1.msra.mxu0 0.0
    %978 = vmatprep.subr.mxu0 0.0
    %979 = vmatpush1.msra.mxu0 0.0
    %980 = vmatprep.subr.mxu0 0.0
    %981 = vmatpush1.msra.mxu0 0.0
    %982 = vmatprep.subr.mxu0 0.0
    %983 = vmatpush1.msra.mxu0 0.0
    %984 = vmatprep.subr.mxu0 0.0
    %985 = vmatpush1.msra.mxu0 0.0
    %986 = vmatprep.subr.mxu0 0.0
    %987 = vmatpush1.msra.mxu0 0.0
    %988 = vmatprep.subr.mxu0 0.0
    %989 = vmatpush1.msra.mxu0 0.0
    %990 = vmatprep.subr.mxu0 0.0
    %991 = vmatpush1.msra.mxu0 0.0
    %992 = vmatprep.subr.mxu0 0.0
    %993 = vmatpush1.msra.mxu0 0.0
    %994 = vmatprep.subr.mxu0 0.0
    %995 = vmatpush1.msra.mxu0 0.0
    %996 = vmatprep.subr.mxu0 0.0
    %997 = vmatpush1.msra.mxu0 0.0
    %998 = vmatprep.subr.mxu0 0.0
    %999 = vmatpush1.msra.mxu0 0.0
    %1000 = vmatprep.subr.mxu0 0.0
    %1001 = vmatpush1.msra.mxu0 0.0
    %1002 = vmatprep.subr.mxu0 0.0
    %1003 = vmatpush1.msra.mxu0 0.0
    %1004 = vmatprep.subr.mxu0 0.0
    %1005 = vmatpush1.msra.mxu0 0.0
    %1006 = vmatprep.mubr.f32.mxu0 0.0
    %1007 = vmatmul.mubr.f32.gmra.mrb[0].mxu0 %v940
    %v1008 = vpop.f32.mrb[0].mxu0
    %v1009 = vadd.f32 %v937, %v1008
    %v1010 = vpop.f32.mrb[0].mxu0
    %1011 = vdwg.mxu0
    %v1012 = vmul.f32 %v1009, 0.5
    %v1013 = vmul.f32 %v1009, 0.70710677
    %v1014 = verf.f32.pop %v1013
    %v1015 = vadd.f32 %v1014, 1.0
    %v1016 = vmul.f32 %v1012, %v1015
    %v1017 = vld [vmem:[#allocation7 + $0x30] sm:$0xff]
    %v1018 = vld [vmem:[#allocation7 + $0x38] sm:$0xff]
    %v1019 = vld [vmem:[#allocation7 + $0x40] sm:$0xff]
    %v1020 = vld [vmem:[#allocation7 + $0x48] sm:$0xff]
    %v1021 = vld [vmem:[#allocation7 + $0x50] sm:$0x1]
    %v1022 = vlaneseq
    %v1023 = vshrl.u32 %v1022, 7
    %v1024 = vsub.s32 0, %v1023
    %v1025 = vrot.slane %v1021, %v1024
    %v1027 = vsel %vm938, %v1016, 0
    %1029 = vmatprep.subr.mxu0 0.0
    %1030 = vmatpush1.msra.mxu0 %v1017
    %1031 = vmatprep.subr.mxu0 0.0
    %1032 = vmatpush1.msra.mxu0 %v1018
    %1033 = vmatprep.subr.mxu0 0.0
    %1034 = vmatpush1.msra.mxu0 %v1019
    %1035 = vmatprep.subr.mxu0 0.0
    %1036 = vmatpush1.msra.mxu0 %v1020
    %1037 = vmatprep.subr.mxu0 0.0
    %1038 = vmatpush1.msra.mxu0 0.0
    %1039 = vmatprep.subr.mxu0 0.0
    %1040 = vmatpush1.msra.mxu0 0.0
    %1041 = vmatprep.subr.mxu0 0.0
    %1042 = vmatpush1.msra.mxu0 0.0
    %1043 = vmatprep.subr.mxu0 0.0
    %1044 = vmatpush1.msra.mxu0 0.0
    %1045 = vmatprep.subr.mxu0 0.0
    %1046 = vmatpush1.msra.mxu0 0.0
    %1047 = vmatprep.subr.mxu0 0.0
    %1048 = vmatpush1.msra.mxu0 0.0
    %1049 = vmatprep.subr.mxu0 0.0
    %1050 = vmatpush1.msra.mxu0 0.0
    %1051 = vmatprep.subr.mxu0 0.0
    %1052 = vmatpush1.msra.mxu0 0.0
    %1053 = vmatprep.subr.mxu0 0.0
    %1054 = vmatpush1.msra.mxu0 0.0
    %1055 = vmatprep.subr.mxu0 0.0
    %1056 = vmatpush1.msra.mxu0 0.0
    %1057 = vmatprep.subr.mxu0 0.0
    %1058 = vmatpush1.msra.mxu0 0.0
    %1059 = vmatprep.subr.mxu0 0.0
    %1060 = vmatpush1.msra.mxu0 0.0
    %1061 = vmatprep.subr.mxu0 0.0
    %1062 = vmatpush1.msra.mxu0 0.0
    %1063 = vmatprep.subr.mxu0 0.0
    %1064 = vmatpush1.msra.mxu0 0.0
    %1065 = vmatprep.subr.mxu0 0.0
    %1066 = vmatpush1.msra.mxu0 0.0
    %1067 = vmatprep.subr.mxu0 0.0
    %1068 = vmatpush1.msra.mxu0 0.0
    %1069 = vmatprep.subr.mxu0 0.0
    %1070 = vmatpush1.msra.mxu0 0.0
    %1071 = vmatprep.subr.mxu0 0.0
    %1072 = vmatpush1.msra.mxu0 0.0
    %1073 = vmatprep.subr.mxu0 0.0
    %1074 = vmatpush1.msra.mxu0 0.0
    %1075 = vmatprep.subr.mxu0 0.0
    %1076 = vmatpush1.msra.mxu0 0.0
    %1077 = vmatprep.subr.mxu0 0.0
    %1078 = vmatpush1.msra.mxu0 0.0
    %1079 = vmatprep.subr.mxu0 0.0
    %1080 = vmatpush1.msra.mxu0 0.0
    %1081 = vmatprep.subr.mxu0 0.0
    %1082 = vmatpush1.msra.mxu0 0.0
    %1083 = vmatprep.subr.mxu0 0.0
    %1084 = vmatpush1.msra.mxu0 0.0
    %1085 = vmatprep.subr.mxu0 0.0
    %1086 = vmatpush1.msra.mxu0 0.0
    %1087 = vmatprep.subr.mxu0 0.0
    %1088 = vmatpush1.msra.mxu0 0.0
    %1089 = vmatprep.subr.mxu0 0.0
    %1090 = vmatpush1.msra.mxu0 0.0
    %1091 = vmatprep.subr.mxu0 0.0
    %1092 = vmatpush1.msra.mxu0 0.0
    %1093 = vmatprep.mubr.f32.mxu0 0.0
    %1094 = vmatmul.mubr.f32.gmra.mrb[0].mxu0 %v1027
    %v1095 = vpop.f32.mrb[0].mxu0
    %v1096 = vadd.f32 %v1025, %v1095
    %v1097 = vpop.f32.mrb[0].mxu0
    %1098 = vdwg.mxu0
    %1099 = vst [vmem:[#allocation8] sm:$0xff] %v1096
    // Predicated region
    $region26: #{tpu_custom_call.1} parent=1 // pred_check
      _
    $region27: #{tpu_custom_call.1} parent=1 // pred_check_branch
      %1101 = sbr.rel (0) target = $region29
    $region28: #{tpu_custom_call.1} parent=1 // pred_region
      %s1103 = ssub.s32 128, 128
      %1104 = vsyncadd [#allocation4], %s1103
      %s1106 = sshll.u32 [#allocation8], 4
      %s1107 = int_to_ptr.vmem [resolvable:$true] %s1106
      %1109 = dma.vmem_to_hbm [thread:$0]  %s1107, 128, %s3, [#allocation4]
    $region29: #{tpu_custom_call.1} parent=1 // pred_fallthru
      _
    // Predicated region
    $region30: #{tpu_custom_call.1} parent=1 // pred_check
      _
    $region31: #{tpu_custom_call.1} parent=1 // pred_check_branch
      %1111 = sbr.rel (0) target = $region33
    $region32: #{tpu_custom_call.1} parent=1 // pred_region
      %1112 = dma.done [#allocation4], 128
    $region33: #{tpu_custom_call.1} parent=1 // pred_fallthru
      _
    %1113 = vsyncpa [#allocation3], 1
    %1114 = vsyncpa [#allocation6], 1
    %1115 = vsyncpa [#allocation4], 1

</llo_original>
